<compile_context>
chip_gen: v7x
topology: tpu7x:2x2x1
jax: 0.10.0
libtpu: 0.0.40
codegen_flags: <defaults>
</compile_context>

<pallas_src>
import jax
import jax.numpy as jnp
from jax import lax
from jax.experimental import pallas as pl
from jax.experimental.pallas import tpu as pltpu

BN_EPS = 1e-5


def _round_up(n, m):
    return ((n + m - 1) // m) * m


def _choose_tiling(B, max_tile_b):
    """Pick (B_pad, tile_b, num_tiles): large tiles, >=2 steps when possible."""
    b128 = _round_up(max(B, 1), 128)
    max_tile_b = max(128, _round_up(max_tile_b, 128))
    num_tiles = pl.cdiv(b128, max_tile_b)
    if b128 >= 256:
        # Keep at least 2 grid steps so the "parallel" batch axis can shard
        # across both TensorCores on v7x megacore parts.
        num_tiles = max(num_tiles, 2)
    tile_b = _round_up(pl.cdiv(b128, num_tiles), 128)
    return tile_b * num_tiles, tile_b, num_tiles


def _mlp_kernel(x_ref, w1_ref, b1_ref, w2_ref, b2_ref, w3_ref, b3_ref, o_ref):
    # x_ref : (F, TILE_B) bf16  (feature-major, lane-dense on batch)
    # w1    : (H1, F) bf16      b1: (H1, 1) f32
    # w2    : (H2, H1) bf16 (BN1 folded)   b2: (H2, 1) f32
    # w3    : (H2, 1) f32 (BN2 folded)     b3: SMEM (1,) f32
    # o_ref : (1, TILE_B) f32

    # Layer 1: h1 = W1 @ x  -> (H1, TILE_B), f32 accumulation on the MXU.
    h1 = lax.dot_general(
        w1_ref[...], x_ref[...], (((1,), (0,)), ((), ())),
        preferred_element_type=jnp.float32)
    h1 = jnp.maximum(h1 + b1_ref[...], 0.0)

    # Layer 2 (BN1 pre-folded into W2/b2): h2 = W2' @ h1 -> (H2, TILE_B).
    # Cast the activation back to bf16 so the MXU stays on the fast path.
    h2 = lax.dot_general(
        w2_ref[...], h1.astype(jnp.bfloat16), (((1,), (0,)), ((), ())),
        preferred_element_type=jnp.float32)
    h2 = jnp.maximum(h2 + b2_ref[...], 0.0)

    # Output layer (BN2 pre-folded into w3/b3): 64 -> 1 projection as a VPU
    # multiply + sublane reduce, sigmoid on the EUP, lane-dense (1, TILE_B) store.
    logits = jnp.sum(h2 * w3_ref[...], axis=0, keepdims=True) + b3_ref[0]
    o_ref[...] = jax.nn.sigmoid(logits)


def ransomware_detector_forward(x, kparams, *, tile_b=8192):
    """Fused MLP forward pass. x: [B, input_size] f32. kparams: folded params."""
    B, F = x.shape
    H1 = kparams["w1"].shape[0]
    H2 = kparams["w2f"].shape[0]

    B_pad, tile_b, num_tiles = _choose_tiling(B, tile_b)

    # Host-side layout plumbing: pad batch, go feature-major, cast to bf16.
    if B_pad != B:
        x = jnp.pad(x, ((0, B_pad - B), (0, 0)))
    xt = x.T.astype(jnp.bfloat16)                          # (F, B_pad)

    in_specs = [
        pl.BlockSpec((F, tile_b), lambda i: (0, i)),        # x tile (pipelined)
        pl.BlockSpec((H1, F), lambda i: (0, 0)),            # W1 (resident, bf16)
        pl.BlockSpec((H1, 1), lambda i: (0, 0)),            # b1 (resident)
        pl.BlockSpec((H2, H1), lambda i: (0, 0)),           # W2' (BN1 folded, bf16)
        pl.BlockSpec((H2, 1), lambda i: (0, 0)),            # b2'
        pl.BlockSpec((H2, 1), lambda i: (0, 0)),            # w3' column (f32)
        pl.BlockSpec(memory_space=pltpu.MemorySpace.SMEM),  # b3' scalar
    ]
    out_specs = pl.BlockSpec((1, tile_b), lambda i: (0, i))

    flops = 2 * B_pad * (F * H1 + H1 * H2 + H2)
    bytes_accessed = (2 * B_pad * F            # bf16 x
                      + 4 * B_pad              # f32 output
                      + 2 * (H1 * F + H2 * H1)  # bf16 weights
                      + 4 * (H1 + 2 * H2 + 1))  # f32 biases + w3 column
    transcendentals = 2 * B_pad               # sigmoid = exp + reciprocal

    out = pl.pallas_call(
        _mlp_kernel,
        grid=(num_tiles,),
        in_specs=in_specs,
        out_specs=out_specs,
        out_shape=jax.ShapeDtypeStruct((1, B_pad), jnp.float32),
        compiler_params=pltpu.CompilerParams(dimension_semantics=("parallel",)),
        cost_estimate=pl.CostEstimate(
            flops=flops, transcendentals=transcendentals,
            bytes_accessed=bytes_accessed),
    )(xt, kparams["w1"], kparams["b1c"], kparams["w2f"], kparams["b2f"],
      kparams["w3c"], kparams["b3f"])

    return out[0, :B].reshape(B, 1)


def init_params(key, input_size, hidden_sizes=(128, 64)):
    """Deterministic synthetic parameters in native PyTorch layout ([out, in])."""
    h1, h2 = hidden_sizes
    keys = jax.random.split(key, 12)

    def lin(kw, kb, fan_out, fan_in):
        w = jax.random.normal(kw, (fan_out, fan_in), jnp.float32) / jnp.sqrt(fan_in)
        b = 0.01 * jax.random.normal(kb, (fan_out,), jnp.float32)
        return w, b

    w1, b1 = lin(keys[0], keys[1], h1, input_size)
    w2, b2 = lin(keys[2], keys[3], h2, h1)
    w3, b3 = lin(keys[4], keys[5], 1, h2)

    def bn(kg, kb, km, n):
        gamma = 1.0 + 0.1 * jax.random.normal(kg, (n,), jnp.float32)
        beta = 0.1 * jax.random.normal(kb, (n,), jnp.float32)
        mean = 0.1 * jax.random.normal(km, (n,), jnp.float32)
        var = jnp.ones((n,), jnp.float32)  # PyTorch default running_var
        scale = gamma / jnp.sqrt(var + BN_EPS)
        shift = beta - mean * scale
        return scale, shift

    s1, t1 = bn(keys[6], keys[7], keys[8], h1)
    s2, t2 = bn(keys[9], keys[10], keys[11], h2)
    return {"w1": w1, "b1": b1, "w2": w2, "b2": b2, "w3": w3, "b3": b3,
            "bn1_scale": s1, "bn1_shift": t1, "bn2_scale": s2, "bn2_shift": t2}


def fold_params(p):
    """Fold eval-mode BN affines into the following Linear (exact, post-ReLU),
    lay out tensors for the feature-major kernel, cast matmul weights to bf16."""
    w2f = p["w2"] * p["bn1_scale"][None, :]              # (H2, H1)
    b2f = p["w2"] @ p["bn1_shift"] + p["b2"]             # (H2,)
    w3f = p["w3"] * p["bn2_scale"][None, :]              # (1, H2)
    b3f = p["w3"] @ p["bn2_shift"] + p["b3"]             # (1,)
    return {
        "w1": p["w1"].astype(jnp.bfloat16),              # (H1, F)  bf16
        "b1c": p["b1"][:, None],                         # (H1, 1)  f32
        "w2f": w2f.astype(jnp.bfloat16),                 # (H2, H1) bf16
        "b2f": b2f[:, None],                             # (H2, 1)  f32
        "w3c": w3f[0][:, None],                          # (H2, 1)  f32
        "b3f": b3f,                                      # (1,)     SMEM scalar
    }


def reference_forward(x, p):
    """Pure-JAX f32 reference matching the PyTorch eval-mode forward."""
    h = jnp.maximum(x @ p["w1"].T + p["b1"], 0.0)
    h = h * p["bn1_scale"] + p["bn1_shift"]
    h = jnp.maximum(h @ p["w2"].T + p["b2"], 0.0)
    h = h * p["bn2_scale"] + p["bn2_shift"]
    return jax.nn.sigmoid(h @ p["w3"].T + p["b3"])


# TODO(synk): training-mode BatchNorm (batch-stat update) and stochastic Dropout
# are not implemented; this kernel reproduces eval/inference semantics only.

if __name__ == "__main__":
    key = jax.random.PRNGKey(0)
    k_x, k_p = jax.random.split(key)

    batch = 16
    input_size = 32  # number of ransomware features
    x = jax.random.normal(k_x, (batch, input_size), jnp.float32)

    params = init_params(k_p, input_size, hidden_sizes=(128, 64))
    kparams = fold_params(params)

    out = jax.block_until_ready(ransomware_detector_forward(x, kparams))
    ref = reference_forward(x, params)

    assert out.shape == (batch, 1)
    # bf16 matmul inputs (f32 accumulation) vs the f32 reference: allow bf16-level slack.
    assert jnp.allclose(out, ref, atol=2e-2, rtol=0.0), "mismatch vs reference"
    assert bool(jnp.all((out >= 0.0) & (out <= 1.0)))

    print("KERNEL_OK")
</pallas_src>

<mosaic_0001>
module attributes {stable_mosaic.version = 11 : i64} {
  func.func @_mlp_kernel(%arg0: i32, %arg1: memref<32x128xbf16, #tpu.memory_space<vmem>>, %arg2: memref<128x32xbf16, #tpu.memory_space<vmem>>, %arg3: memref<128x1xf32, #tpu.memory_space<vmem>>, %arg4: memref<64x128xbf16, #tpu.memory_space<vmem>>, %arg5: memref<64x1xf32, #tpu.memory_space<vmem>>, %arg6: memref<64x1xf32, #tpu.memory_space<vmem>>, %arg7: memref<1xf32, #tpu.memory_space<smem>>, %arg8: memref<1x128xf32, #tpu.memory_space<vmem>>) attributes {dimension_semantics = [#tpu.dimension_semantics<parallel>], iteration_bounds = array<i64: 1>, scalar_prefetch = 0 : i64, scratch_operands = 0 : i64, tpu.core_type = #tpu.core_type<tc>, window_params = [{transform_indices = @transform_0, window_bounds = array<i64: 32, 128>}, {pipeline_mode = #tpu.pipeline_mode<synchronous>, transform_indices = @transform_1, window_bounds = array<i64: 128, 32>}, {pipeline_mode = #tpu.pipeline_mode<synchronous>, transform_indices = @transform_2, window_bounds = array<i64: 128, 1>}, {pipeline_mode = #tpu.pipeline_mode<synchronous>, transform_indices = @transform_3, window_bounds = array<i64: 64, 128>}, {pipeline_mode = #tpu.pipeline_mode<synchronous>, transform_indices = @transform_4, window_bounds = array<i64: 64, 1>}, {pipeline_mode = #tpu.pipeline_mode<synchronous>, transform_indices = @transform_5, window_bounds = array<i64: 64, 1>}, {transform_indices = @transform_6, window_bounds = array<i64: 1>}, {transform_indices = @transform_7, window_bounds = array<i64: 1, 128>}]} {
    %c0 = arith.constant 0 : index
    %c0_0 = arith.constant 0 : index
    %0 = vector.load %arg2[%c0, %c0_0] : memref<128x32xbf16, #tpu.memory_space<vmem>>, vector<128x32xbf16>
    %c0_1 = arith.constant 0 : index
    %c0_2 = arith.constant 0 : index
    %1 = vector.load %arg1[%c0_1, %c0_2] : memref<32x128xbf16, #tpu.memory_space<vmem>>, vector<32x128xbf16>
    %cst = arith.constant dense<0.000000e+00> : vector<128x128xf32>
    %2 = tpu.matmul %0, %1, %cst {dimension_numbers = #tpu.dot_dimension_numbers<[1], [0], [0], [1], [0, 0, 1, 1], [], []>} : vector<128x32xbf16>, vector<32x128xbf16>, vector<128x128xf32> -> vector<128x128xf32>
    %c0_3 = arith.constant 0 : index
    %c0_4 = arith.constant 0 : index
    %3 = vector.load %arg3[%c0_3, %c0_4] : memref<128x1xf32, #tpu.memory_space<vmem>>, vector<128x1xf32>
    %4 = vector.broadcast %3 : vector<128x1xf32> to vector<128x128xf32>
    %5 = arith.addf %2, %4 : vector<128x128xf32>
    %cst_5 = arith.constant 0.000000e+00 : f32
    %6 = vector.broadcast %cst_5 : f32 to vector<128x128xf32>
    %7 = arith.maximumf %5, %6 : vector<128x128xf32>
    %c0_6 = arith.constant 0 : index
    %c0_7 = arith.constant 0 : index
    %8 = vector.load %arg4[%c0_6, %c0_7] : memref<64x128xbf16, #tpu.memory_space<vmem>>, vector<64x128xbf16>
    %9 = arith.truncf %7 : vector<128x128xf32> to vector<128x128xbf16>
    %cst_8 = arith.constant dense<0.000000e+00> : vector<64x128xf32>
    %10 = tpu.matmul %8, %9, %cst_8 {dimension_numbers = #tpu.dot_dimension_numbers<[1], [0], [0], [1], [0, 0, 1, 1], [], []>} : vector<64x128xbf16>, vector<128x128xbf16>, vector<64x128xf32> -> vector<64x128xf32>
    %c0_9 = arith.constant 0 : index
    %c0_10 = arith.constant 0 : index
    %11 = vector.load %arg5[%c0_9, %c0_10] : memref<64x1xf32, #tpu.memory_space<vmem>>, vector<64x1xf32>
    %12 = vector.broadcast %11 : vector<64x1xf32> to vector<64x128xf32>
    %13 = arith.addf %10, %12 : vector<64x128xf32>
    %cst_11 = arith.constant 0.000000e+00 : f32
    %14 = vector.broadcast %cst_11 : f32 to vector<64x128xf32>
    %15 = arith.maximumf %13, %14 : vector<64x128xf32>
    %c0_12 = arith.constant 0 : index
    %c0_13 = arith.constant 0 : index
    %16 = vector.load %arg6[%c0_12, %c0_13] : memref<64x1xf32, #tpu.memory_space<vmem>>, vector<64x1xf32>
    %17 = vector.broadcast %16 : vector<64x1xf32> to vector<64x128xf32>
    %18 = arith.mulf %15, %17 : vector<64x128xf32>
    %cst_14 = arith.constant dense<0.000000e+00> : vector<128xf32>
    %19 = vector.multi_reduction <add>, %18, %cst_14 [0] : vector<64x128xf32> to vector<128xf32>
    %20 = vector.shape_cast %19 : vector<128xf32> to vector<1x128xf32>
    %c0_15 = arith.constant 0 : index
    %21 = memref.load %arg7[%c0_15] : memref<1xf32, #tpu.memory_space<smem>>
    %22 = vector.broadcast %21 : f32 to vector<1x128xf32>
    %23 = arith.addf %20, %22 : vector<1x128xf32>
    %24 = arith.negf %23 : vector<1x128xf32>
    %25 = math.exp %24 : vector<1x128xf32>
    %cst_16 = arith.constant 1.000000e+00 : f32
    %26 = vector.broadcast %cst_16 : f32 to vector<1x128xf32>
    %27 = arith.addf %26, %25 : vector<1x128xf32>
    %28 = arith.divf %26, %27 : vector<1x128xf32>
    %c0_17 = arith.constant 0 : index
    %c0_18 = arith.constant 0 : index
    %29 = vector.load %arg8[%c0_17, %c0_18] : memref<1x128xf32, #tpu.memory_space<vmem>>, vector<1x128xf32>
    tpu.vector_store %arg8[%c0_17, %c0_18], %28 {strides = array<i32>} : memref<1x128xf32, #tpu.memory_space<vmem>>, vector<1x128xf32>,
    return
  }
  func.func @transform_0(%arg0: i32) -> (i32, i32) {
    %c0_i32 = arith.constant 0 : i32
    %c0_i32_0 = arith.constant 0 : i32
    return %c0_i32, %arg0 : i32, i32
  }
  func.func @transform_1(%arg0: i32) -> (i32, i32) {
    %c0_i32 = arith.constant 0 : i32
    %c0_i32_0 = arith.constant 0 : i32
    %c0_i32_1 = arith.constant 0 : i32
    return %c0_i32, %c0_i32_0 : i32, i32
  }
  func.func @transform_2(%arg0: i32) -> (i32, i32) {
    %c0_i32 = arith.constant 0 : i32
    %c0_i32_0 = arith.constant 0 : i32
    %c0_i32_1 = arith.constant 0 : i32
    return %c0_i32, %c0_i32_0 : i32, i32
  }
  func.func @transform_3(%arg0: i32) -> (i32, i32) {
    %c0_i32 = arith.constant 0 : i32
    %c0_i32_0 = arith.constant 0 : i32
    %c0_i32_1 = arith.constant 0 : i32
    return %c0_i32, %c0_i32_0 : i32, i32
  }
  func.func @transform_4(%arg0: i32) -> (i32, i32) {
    %c0_i32 = arith.constant 0 : i32
    %c0_i32_0 = arith.constant 0 : i32
    %c0_i32_1 = arith.constant 0 : i32
    return %c0_i32, %c0_i32_0 : i32, i32
  }
  func.func @transform_5(%arg0: i32) -> (i32, i32) {
    %c0_i32 = arith.constant 0 : i32
    %c0_i32_0 = arith.constant 0 : i32
    %c0_i32_1 = arith.constant 0 : i32
    return %c0_i32, %c0_i32_0 : i32, i32
  }
  func.func @transform_6(%arg0: i32) -> i32 {
    %c0_i32 = arith.constant 0 : i32
    %c0_i32_0 = arith.constant 0 : i32
    return %c0_i32 : i32
  }
  func.func @transform_7(%arg0: i32) -> (i32, i32) {
    %c0_i32 = arith.constant 0 : i32
    %c0_i32_0 = arith.constant 0 : i32
    return %c0_i32, %arg0 : i32, i32
  }
}

</mosaic_0001>

<llo_original>
// kernel: tpu_custom_call.1
$region0: #{tpu_custom_call.1}
  #allocation0 [shape = 'u32[]', space=smem, size = 0x4, offset = 0x4, fixed_abs, tag = 'smem constant byte address 0x4 - core index']
  #allocation1 [shape = 'u32[144,128]{1,0:T(1,128)}', space=vmem, size = 0x12000, scoped, tag = 'internal scratch']
  #allocation2 [shape = 'f32[1]{0:T(128)S(6)}', space=smem, size = 0x200, scoped, tag = 'scoped memory for tpu_custom_call.1']
  %s0 = inlined_call_operand.vmem [shape: bf16[32,128], index: 0, kind: input, shape index: {}]
  %s1 = inlined_call_operand.vmem [shape: bf16[128,32], index: 1, kind: input, shape index: {}]
  %s2 = inlined_call_operand.vmem [shape: f32[128,1], index: 2, kind: input, shape index: {}]
  %s3 = inlined_call_operand.vmem [shape: bf16[64,128], index: 3, kind: input, shape index: {}]
  %s4 = inlined_call_operand.vmem [shape: f32[64,1], index: 4, kind: input, shape index: {}]
  %s5 = inlined_call_operand.vmem [shape: f32[64,1], index: 5, kind: input, shape index: {}]
  %s6 = inlined_call_operand.<no memory space> [shape: f32[1], index: 6, kind: input, shape index: {}]
  %s7 = inlined_call_operand.hbm [shape: f32[1,128], index: 7, kind: output, shape index: {}]
  %s8 = sld [smem:[#allocation0]]
  $region38: #{tpu_custom_call.1} parent=0
    _
  %s10 = ssub.s32 1, %s8
  %s11 = scalar_select 0, %s10, %s8
  %12 = sst [smem:[#allocation2]] %s6
  $region1: #{tpu_custom_call.1} parent=0
    #allocation3 [shape = 'u8[512]{0}', space=vmem, size = 0x400, scoped, tag = 'output window, operand 0, single buffered']
    #allocation4 [shape = 's32[1]{0}', space=sflag, size = 0x4, scoped, tag = 'scoped memory for tpu_custom_call.1']
    %13 = vsyncpa [#allocation4], 0
    // Predicated region
    $region2: #{tpu_custom_call.1} parent=1 // pred_check
      _
    $region3: #{tpu_custom_call.1} parent=1 // pred_check_branch
      %15 = sbr.rel (0) target = $region5
    $region4: #{tpu_custom_call.1} parent=1 // pred_region
      _
    $region5: #{tpu_custom_call.1} parent=1 // pred_fallthru
      _
    // Predicated region
    $region6: #{tpu_custom_call.1} parent=1 // pred_check
      _
    $region7: #{tpu_custom_call.1} parent=1 // pred_check_branch
      %17 = sbr.rel (0) target = $region9
    $region8: #{tpu_custom_call.1} parent=1 // pred_region
      _
    $region9: #{tpu_custom_call.1} parent=1 // pred_fallthru
      _
    // Predicated region
    $region10: #{tpu_custom_call.1} parent=1 // pred_check
      _
    $region11: #{tpu_custom_call.1} parent=1 // pred_check_branch
      %19 = sbr.rel (0) target = $region13
    $region12: #{tpu_custom_call.1} parent=1 // pred_region
      _
    $region13: #{tpu_custom_call.1} parent=1 // pred_fallthru
      _
    // Predicated region
    $region14: #{tpu_custom_call.1} parent=1 // pred_check
      _
    $region15: #{tpu_custom_call.1} parent=1 // pred_check_branch
      %21 = sbr.rel (0) target = $region17
    $region16: #{tpu_custom_call.1} parent=1 // pred_region
      _
    $region17: #{tpu_custom_call.1} parent=1 // pred_fallthru
      _
    // Predicated region
    $region18: #{tpu_custom_call.1} parent=1 // pred_check
      _
    $region19: #{tpu_custom_call.1} parent=1 // pred_check_branch
      %23 = sbr.rel (0) target = $region21
    $region20: #{tpu_custom_call.1} parent=1 // pred_region
      _
    $region21: #{tpu_custom_call.1} parent=1 // pred_fallthru
      _
    // Predicated region
    $region22: #{tpu_custom_call.1} parent=1 // pred_check
      _
    $region23: #{tpu_custom_call.1} parent=1 // pred_check_branch
      %25 = sbr.rel (0) target = $region25
    $region24: #{tpu_custom_call.1} parent=1 // pred_region
      _
    $region25: #{tpu_custom_call.1} parent=1 // pred_fallthru
      _
    // Predicated region
    $region26: #{tpu_custom_call.1} parent=1 // pred_check
      _
    $region27: #{tpu_custom_call.1} parent=1 // pred_check_branch
      %27 = sbr.rel (0) target = $region29
    $region28: #{tpu_custom_call.1} parent=1 // pred_region
      _
    $region29: #{tpu_custom_call.1} parent=1 // pred_fallthru
      _
    %v29 = vld [vmem:[%s1] sm:$0xf]
    %v30 = vld [vmem:[%s1 + $0x4] sm:$0xf]
    %v31 = vld [vmem:[%s1 + $0x8] sm:$0xf]
    %v32 = vld [vmem:[%s1 + $0xc] sm:$0xf]
    %v33 = vld [vmem:[%s1 + $0x10] sm:$0xf]
    %v34 = vld [vmem:[%s1 + $0x14] sm:$0xf]
    %v35 = vld [vmem:[%s1 + $0x18] sm:$0xf]
    %v36 = vld [vmem:[%s1 + $0x1c] sm:$0xf]
    %v37 = vld [vmem:[%s1 + $0x20] sm:$0xf]
    %v38 = vld [vmem:[%s1 + $0x24] sm:$0xf]
    %v39 = vld [vmem:[%s1 + $0x28] sm:$0xf]
    %v40 = vld [vmem:[%s1 + $0x2c] sm:$0xf]
    %v41 = vld [vmem:[%s1 + $0x30] sm:$0xf]
    %v42 = vld [vmem:[%s1 + $0x34] sm:$0xf]
    %v43 = vld [vmem:[%s1 + $0x38] sm:$0xf]
    %v44 = vld [vmem:[%s1 + $0x3c] sm:$0xf]
    %v45 = vld [vmem:[%s0] sm:$0xf]
    %v46 = vld [vmem:[%s0 + $0x4] sm:$0xf]
    %v47 = vld [vmem:[%s0 + $0x8] sm:$0xf]
    %v48 = vld [vmem:[%s0 + $0xc] sm:$0xf]
    %v49 = vld [vmem:[%s2] sm:$0xff]
    %v50 = vld [vmem:[%s2 + $0x8] sm:$0xff]
    %v51 = vld [vmem:[%s2 + $0x10] sm:$0xff]
    %v52 = vld [vmem:[%s2 + $0x18] sm:$0xff]
    %v53 = vld [vmem:[%s2 + $0x20] sm:$0xff]
    %v54 = vld [vmem:[%s2 + $0x28] sm:$0xff]
    %v55 = vld [vmem:[%s2 + $0x30] sm:$0xff]
    %v56 = vld [vmem:[%s2 + $0x38] sm:$0xff]
    %v57 = vld [vmem:[%s2 + $0x40] sm:$0xff]
    %v58 = vld [vmem:[%s2 + $0x48] sm:$0xff]
    %v59 = vld [vmem:[%s2 + $0x50] sm:$0xff]
    %v60 = vld [vmem:[%s2 + $0x58] sm:$0xff]
    %v61 = vld [vmem:[%s2 + $0x60] sm:$0xff]
    %v62 = vld [vmem:[%s2 + $0x68] sm:$0xff]
    %v63 = vld [vmem:[%s2 + $0x70] sm:$0xff]
    %v64 = vld [vmem:[%s2 + $0x78] sm:$0xff]
    %66 = vset.pattern.permute.xlu0 0
    %67 = vperm.xlu0 %66, %v49
    %v68 = vpop.permute.xlu0 %67
    %71 = vset.pattern.permute.xlu0 0
    %72 = vperm.xlu0 %71, %v50
    %v73 = vpop.permute.xlu0 %72
    %76 = vset.pattern.permute.xlu0 0
    %77 = vperm.xlu0 %76, %v51
    %v78 = vpop.permute.xlu0 %77
    %81 = vset.pattern.permute.xlu0 0
    %82 = vperm.xlu0 %81, %v52
    %v83 = vpop.permute.xlu0 %82
    %86 = vset.pattern.permute.xlu0 0
    %87 = vperm.xlu0 %86, %v53
    %v88 = vpop.permute.xlu0 %87
    %91 = vset.pattern.permute.xlu0 0
    %92 = vperm.xlu0 %91, %v54
    %v93 = vpop.permute.xlu0 %92
    %96 = vset.pattern.permute.xlu0 0
    %97 = vperm.xlu0 %96, %v55
    %v98 = vpop.permute.xlu0 %97
    %101 = vset.pattern.permute.xlu0 0
    %102 = vperm.xlu0 %101, %v56
    %v103 = vpop.permute.xlu0 %102
    %106 = vset.pattern.permute.xlu0 0
    %107 = vperm.xlu0 %106, %v57
    %v108 = vpop.permute.xlu0 %107
    %111 = vset.pattern.permute.xlu0 0
    %112 = vperm.xlu0 %111, %v58
    %v113 = vpop.permute.xlu0 %112
    %116 = vset.pattern.permute.xlu0 0
    %117 = vperm.xlu0 %116, %v59
    %v118 = vpop.permute.xlu0 %117
    %121 = vset.pattern.permute.xlu0 0
    %122 = vperm.xlu0 %121, %v60
    %v123 = vpop.permute.xlu0 %122
    %126 = vset.pattern.permute.xlu0 0
    %127 = vperm.xlu0 %126, %v61
    %v128 = vpop.permute.xlu0 %127
    %131 = vset.pattern.permute.xlu0 0
    %132 = vperm.xlu0 %131, %v62
    %v133 = vpop.permute.xlu0 %132
    %136 = vset.pattern.permute.xlu0 0
    %137 = vperm.xlu0 %136, %v63
    %v138 = vpop.permute.xlu0 %137
    %141 = vset.pattern.permute.xlu0 0
    %142 = vperm.xlu0 %141, %v64
    %v143 = vpop.permute.xlu0 %142
    %v161 = vunpack.c.l.b16 %v29
    %v162 = vunpack.c.l.b16 %v30
    %v163 = vunpack.c.l.b16 %v31
    %v164 = vunpack.c.l.b16 %v32
    %v165 = vunpack.c.l.b16 %v33
    %v166 = vunpack.c.l.b16 %v34
    %v167 = vunpack.c.l.b16 %v35
    %v168 = vunpack.c.l.b16 %v36
    %v169 = vunpack.c.l.b16 %v37
    %v170 = vunpack.c.l.b16 %v38
    %v171 = vunpack.c.l.b16 %v39
    %v172 = vunpack.c.l.b16 %v40
    %v173 = vunpack.c.l.b16 %v41
    %v174 = vunpack.c.l.b16 %v42
    %v175 = vunpack.c.l.b16 %v43
    %v176 = vunpack.c.l.b16 %v44
    %v177 = vpack.c.b16 %v162, %v161
    %v178 = vpack.c.b16 %v164, %v163
    %v179 = vpack.c.b16 %v166, %v165
    %v180 = vpack.c.b16 %v168, %v167
    %v181 = vpack.c.b16 %v170, %v169
    %v182 = vpack.c.b16 %v172, %v171
    %v183 = vpack.c.b16 %v174, %v173
    %v184 = vpack.c.b16 %v176, %v175
    %v189 = vunpack.c.l.b16 %v45
    %v190 = vunpack.c.l.b16 %v46
    %v191 = vunpack.c.l.b16 %v47
    %v192 = vunpack.c.l.b16 %v48
    %v193 = vpack.c.b16 %v190, %v189
    %v194 = vpack.c.b16 %v192, %v191
    %vm197 = vcmask 261120
    %v199 = vsel %vm197, %v177, 0
    %v202 = vsel %vm197, %v178, 0
    %v205 = vsel %vm197, %v179, 0
    %v208 = vsel %vm197, %v180, 0
    %v211 = vsel %vm197, %v181, 0
    %v214 = vsel %vm197, %v182, 0
    %v217 = vsel %vm197, %v183, 0
    %v220 = vsel %vm197, %v184, 0
    %222 = vmatprep.subr.bf16.mxu0 0
    %223 = vmatpush1.bf16.msra.mxu0 %v193
    %224 = vmatprep.subr.bf16.mxu0 0
    %225 = vmatpush1.bf16.msra.mxu0 %v194
    %226 = vmatprep.subr.bf16.mxu0 0
    %227 = vmatpush1.bf16.msra.mxu0 0
    %228 = vmatprep.subr.bf16.mxu0 0
    %229 = vmatpush1.bf16.msra.mxu0 0
    %230 = vmatprep.subr.bf16.mxu0 0
    %231 = vmatpush1.bf16.msra.mxu0 0
    %232 = vmatprep.subr.bf16.mxu0 0
    %233 = vmatpush1.bf16.msra.mxu0 0
    %234 = vmatprep.subr.bf16.mxu0 0
    %235 = vmatpush1.bf16.msra.mxu0 0
    %236 = vmatprep.subr.bf16.mxu0 0
    %237 = vmatpush1.bf16.msra.mxu0 0
    %238 = vmatprep.subr.bf16.mxu0 0
    %239 = vmatpush1.bf16.msra.mxu0 0
    %240 = vmatprep.subr.bf16.mxu0 0
    %241 = vmatpush1.bf16.msra.mxu0 0
    %242 = vmatprep.subr.bf16.mxu0 0
    %243 = vmatpush1.bf16.msra.mxu0 0
    %244 = vmatprep.subr.bf16.mxu0 0
    %245 = vmatpush1.bf16.msra.mxu0 0
    %246 = vmatprep.subr.bf16.mxu0 0
    %247 = vmatpush1.bf16.msra.mxu0 0
    %248 = vmatprep.subr.bf16.mxu0 0
    %249 = vmatpush1.bf16.msra.mxu0 0
    %250 = vmatprep.subr.bf16.mxu0 0
    %251 = vmatpush1.bf16.msra.mxu0 0
    %252 = vmatprep.subr.bf16.mxu0 0
    %253 = vmatpush1.bf16.msra.mxu0 0
    %254 = vmatprep.mubr.bf16.mxu0 0
    %255 = vmatmul.mubr.bf16.gmra.mrb[0].mxu0 %v199
    %v256 = vpop.f32.mrb[0].mxu0
    %v257 = vadd.f32 %v68, %v256
    %v258 = vpop.f32.mrb[0].mxu0
    %v259 = vpop.f32.mrb[0].mxu0
    %v260 = vadd.f32 %v73, %v259
    %v261 = vpop.f32.mrb[0].mxu0
    %262 = vmatprep.mubr.bf16.mxu0 0
    %263 = vmatmul.mubr.bf16.gmra.mrb[0].mxu0 %v202
    %v264 = vpop.f32.mrb[0].mxu0
    %v265 = vadd.f32 %v78, %v264
    %v266 = vpop.f32.mrb[0].mxu0
    %v267 = vpop.f32.mrb[0].mxu0
    %v268 = vadd.f32 %v83, %v267
    %v269 = vpop.f32.mrb[0].mxu0
    %270 = vmatprep.mubr.bf16.mxu0 0
    %271 = vmatmul.mubr.bf16.gmra.mrb[0].mxu0 %v205
    %v272 = vpop.f32.mrb[0].mxu0
    %v273 = vadd.f32 %v88, %v272
    %v274 = vpop.f32.mrb[0].mxu0
    %v275 = vpop.f32.mrb[0].mxu0
    %v276 = vadd.f32 %v93, %v275
    %v277 = vpop.f32.mrb[0].mxu0
    %278 = vmatprep.mubr.bf16.mxu0 0
    %279 = vmatmul.mubr.bf16.gmra.mrb[0].mxu0 %v208
    %v280 = vpop.f32.mrb[0].mxu0
    %v281 = vadd.f32 %v98, %v280
    %v282 = vpop.f32.mrb[0].mxu0
    %v283 = vpop.f32.mrb[0].mxu0
    %v284 = vadd.f32 %v103, %v283
    %v285 = vpop.f32.mrb[0].mxu0
    %286 = vmatprep.mubr.bf16.mxu0 0
    %287 = vmatmul.mubr.bf16.gmra.mrb[0].mxu0 %v211
    %v288 = vpop.f32.mrb[0].mxu0
    %v289 = vadd.f32 %v108, %v288
    %v290 = vpop.f32.mrb[0].mxu0
    %v291 = vpop.f32.mrb[0].mxu0
    %v292 = vadd.f32 %v113, %v291
    %v293 = vpop.f32.mrb[0].mxu0
    %294 = vmatprep.mubr.bf16.mxu0 0
    %295 = vmatmul.mubr.bf16.gmra.mrb[0].mxu0 %v214
    %v296 = vpop.f32.mrb[0].mxu0
    %v297 = vadd.f32 %v118, %v296
    %v298 = vpop.f32.mrb[0].mxu0
    %v299 = vpop.f32.mrb[0].mxu0
    %v300 = vadd.f32 %v123, %v299
    %v301 = vpop.f32.mrb[0].mxu0
    %302 = vmatprep.mubr.bf16.mxu0 0
    %303 = vmatmul.mubr.bf16.gmra.mrb[0].mxu0 %v217
    %v304 = vpop.f32.mrb[0].mxu0
    %v305 = vadd.f32 %v128, %v304
    %v306 = vpop.f32.mrb[0].mxu0
    %v307 = vpop.f32.mrb[0].mxu0
    %v308 = vadd.f32 %v133, %v307
    %v309 = vpop.f32.mrb[0].mxu0
    %310 = vmatprep.mubr.bf16.mxu0 0
    %311 = vmatmul.mubr.bf16.gmra.mrb[0].mxu0 %v220
    %v312 = vpop.f32.mrb[0].mxu0
    %v313 = vadd.f32 %v138, %v312
    %v314 = vpop.f32.mrb[0].mxu0
    %v315 = vpop.f32.mrb[0].mxu0
    %v316 = vadd.f32 %v143, %v315
    %v317 = vpop.f32.mrb[0].mxu0
    %318 = vdwg.mxu0
    %v319 = vmax.f32 %v257, 0.0
    %v320 = vmax.f32 %v260, 0.0
    %v321 = vmax.f32 %v265, 0.0
    %v322 = vmax.f32 %v268, 0.0
    %v323 = vmax.f32 %v273, 0.0
    %v324 = vmax.f32 %v276, 0.0
    %v325 = vmax.f32 %v281, 0.0
    %v326 = vmax.f32 %v284, 0.0
    %v327 = vmax.f32 %v289, 0.0
    %v328 = vmax.f32 %v292, 0.0
    %v329 = vmax.f32 %v297, 0.0
    %v330 = vmax.f32 %v300, 0.0
    %v331 = vmax.f32 %v305, 0.0
    %v332 = vmax.f32 %v308, 0.0
    %v333 = vmax.f32 %v313, 0.0
    %v334 = vmax.f32 %v316, 0.0
    %v335 = vld [vmem:[%s3] sm:$0xf]
    %v336 = vld [vmem:[%s3 + $0x4] sm:$0xf]
    %v337 = vld [vmem:[%s3 + $0x8] sm:$0xf]
    %v338 = vld [vmem:[%s3 + $0xc] sm:$0xf]
    %v339 = vld [vmem:[%s3 + $0x10] sm:$0xf]
    %v340 = vld [vmem:[%s3 + $0x14] sm:$0xf]
    %v341 = vld [vmem:[%s3 + $0x18] sm:$0xf]
    %v342 = vld [vmem:[%s3 + $0x1c] sm:$0xf]
    %v343 = vpack.c.bf16 %v320, %v319
    %v344 = vpack.c.bf16 %v322, %v321
    %v345 = vpack.c.bf16 %v324, %v323
    %v346 = vpack.c.bf16 %v326, %v325
    %v347 = vpack.c.bf16 %v328, %v327
    %v348 = vpack.c.bf16 %v330, %v329
    %v349 = vpack.c.bf16 %v332, %v331
    %v350 = vpack.c.bf16 %v334, %v333
    %v351 = vld [vmem:[%s4] sm:$0xff]
    %v352 = vld [vmem:[%s4 + $0x8] sm:$0xff]
    %v353 = vld [vmem:[%s4 + $0x10] sm:$0xff]
    %v354 = vld [vmem:[%s4 + $0x18] sm:$0xff]
    %v355 = vld [vmem:[%s4 + $0x20] sm:$0xff]
    %v356 = vld [vmem:[%s4 + $0x28] sm:$0xff]
    %v357 = vld [vmem:[%s4 + $0x30] sm:$0xff]
    %v358 = vld [vmem:[%s4 + $0x38] sm:$0xff]
    %360 = vset.pattern.permute.xlu0 0
    %361 = vperm.xlu0 %360, %v351
    %v362 = vpop.permute.xlu0 %361
    %365 = vset.pattern.permute.xlu0 0
    %366 = vperm.xlu0 %365, %v352
    %v367 = vpop.permute.xlu0 %366
    %370 = vset.pattern.permute.xlu0 0
    %371 = vperm.xlu0 %370, %v353
    %v372 = vpop.permute.xlu0 %371
    %375 = vset.pattern.permute.xlu0 0
    %376 = vperm.xlu0 %375, %v354
    %v377 = vpop.permute.xlu0 %376
    %380 = vset.pattern.permute.xlu0 0
    %381 = vperm.xlu0 %380, %v355
    %v382 = vpop.permute.xlu0 %381
    %385 = vset.pattern.permute.xlu0 0
    %386 = vperm.xlu0 %385, %v356
    %v387 = vpop.permute.xlu0 %386
    %390 = vset.pattern.permute.xlu0 0
    %391 = vperm.xlu0 %390, %v357
    %v392 = vpop.permute.xlu0 %391
    %395 = vset.pattern.permute.xlu0 0
    %396 = vperm.xlu0 %395, %v358
    %v397 = vpop.permute.xlu0 %396
    %v407 = vunpack.c.l.b16 %v335
    %v408 = vunpack.c.l.b16 %v336
    %v409 = vunpack.c.l.b16 %v337
    %v410 = vunpack.c.l.b16 %v338
    %v411 = vunpack.c.l.b16 %v339
    %v412 = vunpack.c.l.b16 %v340
    %v413 = vunpack.c.l.b16 %v341
    %v414 = vunpack.c.l.b16 %v342
    %v415 = vpack.c.b16 %v408, %v407
    %v416 = vpack.c.b16 %v410, %v409
    %v417 = vpack.c.b16 %v412, %v411
    %v418 = vpack.c.b16 %v414, %v413
    %423 = vmatprep.subr.bf16.mxu0 0
    %424 = vmatpush1.bf16.msra.mxu0 %v343
    %425 = vmatprep.subr.bf16.mxu0 0
    %426 = vmatpush1.bf16.msra.mxu0 %v344
    %427 = vmatprep.subr.bf16.mxu0 0
    %428 = vmatpush1.bf16.msra.mxu0 %v345
    %429 = vmatprep.subr.bf16.mxu0 0
    %430 = vmatpush1.bf16.msra.mxu0 %v346
    %431 = vmatprep.subr.bf16.mxu0 0
    %432 = vmatpush1.bf16.msra.mxu0 %v347
    %433 = vmatprep.subr.bf16.mxu0 0
    %434 = vmatpush1.bf16.msra.mxu0 %v348
    %435 = vmatprep.subr.bf16.mxu0 0
    %436 = vmatpush1.bf16.msra.mxu0 %v349
    %437 = vmatprep.subr.bf16.mxu0 0
    %438 = vmatpush1.bf16.msra.mxu0 %v350
    %439 = vmatprep.subr.bf16.mxu0 0
    %440 = vmatpush1.bf16.msra.mxu0 0
    %441 = vmatprep.subr.bf16.mxu0 0
    %442 = vmatpush1.bf16.msra.mxu0 0
    %443 = vmatprep.subr.bf16.mxu0 0
    %444 = vmatpush1.bf16.msra.mxu0 0
    %445 = vmatprep.subr.bf16.mxu0 0
    %446 = vmatpush1.bf16.msra.mxu0 0
    %447 = vmatprep.subr.bf16.mxu0 0
    %448 = vmatpush1.bf16.msra.mxu0 0
    %449 = vmatprep.subr.bf16.mxu0 0
    %450 = vmatpush1.bf16.msra.mxu0 0
    %451 = vmatprep.subr.bf16.mxu0 0
    %452 = vmatpush1.bf16.msra.mxu0 0
    %453 = vmatprep.subr.bf16.mxu0 0
    %454 = vmatpush1.bf16.msra.mxu0 0
    %455 = vmatprep.mubr.bf16.mxu0 0
    %456 = vmatmul.mubr.bf16.gmra.mrb[0].mxu0 %v415
    %v457 = vpop.f32.mrb[0].mxu0
    %v458 = vadd.f32 %v362, %v457
    %v459 = vpop.f32.mrb[0].mxu0
    %v460 = vpop.f32.mrb[0].mxu0
    %v461 = vadd.f32 %v367, %v460
    %v462 = vpop.f32.mrb[0].mxu0
    %463 = vmatprep.mubr.bf16.mxu0 0
    %464 = vmatmul.mubr.bf16.gmra.mrb[0].mxu0 %v416
    %v465 = vpop.f32.mrb[0].mxu0
    %v466 = vadd.f32 %v372, %v465
    %v467 = vpop.f32.mrb[0].mxu0
    %v468 = vpop.f32.mrb[0].mxu0
    %v469 = vadd.f32 %v377, %v468
    %v470 = vpop.f32.mrb[0].mxu0
    %471 = vmatprep.mubr.bf16.mxu0 0
    %472 = vmatmul.mubr.bf16.gmra.mrb[0].mxu0 %v417
    %v473 = vpop.f32.mrb[0].mxu0
    %v474 = vadd.f32 %v382, %v473
    %v475 = vpop.f32.mrb[0].mxu0
    %v476 = vpop.f32.mrb[0].mxu0
    %v477 = vadd.f32 %v387, %v476
    %v478 = vpop.f32.mrb[0].mxu0
    %479 = vmatprep.mubr.bf16.mxu0 0
    %480 = vmatmul.mubr.bf16.gmra.mrb[0].mxu0 %v418
    %v481 = vpop.f32.mrb[0].mxu0
    %v482 = vadd.f32 %v392, %v481
    %v483 = vpop.f32.mrb[0].mxu0
    %v484 = vpop.f32.mrb[0].mxu0
    %v485 = vadd.f32 %v397, %v484
    %v486 = vpop.f32.mrb[0].mxu0
    %487 = vdwg.mxu0
    %v488 = vmax.f32 %v458, 0.0
    %v489 = vmax.f32 %v461, 0.0
    %v490 = vmax.f32 %v466, 0.0
    %v491 = vmax.f32 %v469, 0.0
    %v492 = vmax.f32 %v474, 0.0
    %v493 = vmax.f32 %v477, 0.0
    %v494 = vmax.f32 %v482, 0.0
    %v495 = vmax.f32 %v485, 0.0
    %v496 = vld [vmem:[%s5] sm:$0xff]
    %v497 = vld [vmem:[%s5 + $0x8] sm:$0xff]
    %v498 = vld [vmem:[%s5 + $0x10] sm:$0xff]
    %v499 = vld [vmem:[%s5 + $0x18] sm:$0xff]
    %v500 = vld [vmem:[%s5 + $0x20] sm:$0xff]
    %v501 = vld [vmem:[%s5 + $0x28] sm:$0xff]
    %v502 = vld [vmem:[%s5 + $0x30] sm:$0xff]
    %v503 = vld [vmem:[%s5 + $0x38] sm:$0xff]
    %505 = vset.pattern.permute.xlu0 0
    %506 = vperm.xlu0 %505, %v496
    %v507 = vpop.permute.xlu0 %506
    %510 = vset.pattern.permute.xlu0 0
    %511 = vperm.xlu0 %510, %v497
    %v512 = vpop.permute.xlu0 %511
    %515 = vset.pattern.permute.xlu0 0
    %516 = vperm.xlu0 %515, %v498
    %v517 = vpop.permute.xlu0 %516
    %520 = vset.pattern.permute.xlu0 0
    %521 = vperm.xlu0 %520, %v499
    %v522 = vpop.permute.xlu0 %521
    %525 = vset.pattern.permute.xlu0 0
    %526 = vperm.xlu0 %525, %v500
    %v527 = vpop.permute.xlu0 %526
    %530 = vset.pattern.permute.xlu0 0
    %531 = vperm.xlu0 %530, %v501
    %v532 = vpop.permute.xlu0 %531
    %535 = vset.pattern.permute.xlu0 0
    %536 = vperm.xlu0 %535, %v502
    %v537 = vpop.permute.xlu0 %536
    %540 = vset.pattern.permute.xlu0 0
    %541 = vperm.xlu0 %540, %v503
    %v542 = vpop.permute.xlu0 %541
    %v544 = vmul.f32 %v488, %v507
    %v545 = vmul.f32 %v489, %v512
    %v546 = vmul.f32 %v490, %v517
    %v547 = vmul.f32 %v491, %v522
    %v548 = vmul.f32 %v492, %v527
    %v549 = vmul.f32 %v493, %v532
    %v550 = vmul.f32 %v494, %v537
    %v551 = vmul.f32 %v495, %v542
    %v552 = vadd.f32 %v544, %v545
    %v553 = vadd.f32 %v552, %v546
    %v554 = vadd.f32 %v553, %v547
    %v555 = vadd.f32 %v554, %v548
    %v556 = vadd.f32 %v555, %v549
    %v557 = vadd.f32 %v556, %v550
    %v558 = vadd.f32 %v557, %v551
    %v559 = vrot.slane %v558, 4
    %v560 = vadd.f32 %v558, %v559
    %v561 = vrot.slane %v560, 2
    %v562 = vadd.f32 %v560, %v561
    %v563 = vrot.slane %v562, 1
    %v564 = vadd.f32 %v562, %v563
    %s565 = sld [smem:[#allocation2]]
    %v566 = vstv %s565
    %v567 = vadd.f32 %v564, %v566
    %v568 = vxor.u32 %v567, 2147483648
    %v569 = vmul.f32 %v568, 1.442695
    %v570 = vpow.pop %v569
    %v571 = vadd.f32 %v570, 1.0
    %v572 = vrcp.pop %v571
    %v573 = vmul.f32 1.0, %v572
    %574 = vst [vmem:[#allocation3] sm:$0x1] %v573
    // Predicated region
    $region30: #{tpu_custom_call.1} parent=1 // pred_check
      _
    $region31: #{tpu_custom_call.1} parent=1 // pred_check_branch
      %576 = sbr.rel (0) target = $region33
    $region32: #{tpu_custom_call.1} parent=1 // pred_region
      %s578 = ssub.s32 16, 16
      %579 = vsyncadd [#allocation4], %s578
      %s581 = sshll.u32 [#allocation3], 4
      %s582 = int_to_ptr.vmem [resolvable:$true] %s581
      %584 = dma.vmem_to_hbm [thread:$0]  %s582, 16, %s7, [#allocation4]
    $region33: #{tpu_custom_call.1} parent=1 // pred_fallthru
      _
    // Predicated region
    $region34: #{tpu_custom_call.1} parent=1 // pred_check
      _
    $region35: #{tpu_custom_call.1} parent=1 // pred_check_branch
      %586 = sbr.rel (0) target = $region37
    $region36: #{tpu_custom_call.1} parent=1 // pred_region
      %587 = dma.done [#allocation4], 16
    $region37: #{tpu_custom_call.1} parent=1 // pred_fallthru
      _
    %588 = vsyncpa [#allocation4], 1

</llo_original>
